<compile_context>
chip_gen: v7x
topology: tpu7x:2x2x1
jax: 0.10.0
libtpu: 0.0.40
codegen_flags: <defaults>
</compile_context>

<pallas_src>
import functools

import jax
import jax.numpy as jnp
from jax.experimental import pallas as pl
from jax.experimental.pallas import tpu as pltpu


def _round_up(x, m):
    return ((x + m - 1) // m) * m


def _linear_kernel_single_k(x_ref, w_ref, b_ref, o_ref):
    # Whole K reduction in one tile: straight MXU matmul + bias, no scratch.
    acc = jnp.dot(x_ref[...], w_ref[...], preferred_element_type=jnp.float32)
    o_ref[...] = (acc + b_ref[...].astype(jnp.float32)).astype(o_ref.dtype)


def _linear_kernel_multi_k(x_ref, w_ref, b_ref, o_ref, acc_ref):
    # x_ref: (tm, tk), w_ref: (tk, tn), b_ref: (1, tn),
    # o_ref: (tm, tn), acc_ref: (tm, tn) f32 scratch.
    k = pl.program_id(2)

    @pl.when(k == 0)
    def _():
        acc_ref[...] = jnp.zeros_like(acc_ref)

    acc_ref[...] += jnp.dot(
        x_ref[...], w_ref[...], preferred_element_type=jnp.float32
    )

    @pl.when(k == pl.num_programs(2) - 1)
    def _():
        o_ref[...] = (
            acc_ref[...] + b_ref[...].astype(jnp.float32)
        ).astype(o_ref.dtype)


@functools.partial(jax.jit, static_argnames=("tm", "tn", "tk", "compute_dtype"))
def linear_forward(x, weight, bias, *, tm=512, tn=512, tk=512, compute_dtype=None):
    """y = x @ weight.T + bias, matching torch.nn.Linear semantics.

    x:      (B, D_in)
    weight: (D_out, D_in)   (PyTorch convention)
    bias:   (D_out,)
    compute_dtype: e.g. jnp.bfloat16 on v6e/v7x; accumulation stays f32.
    """
    B, D_in = x.shape
    D_out = weight.shape[0]
    out_dtype = x.dtype
    cdt = jnp.dtype(compute_dtype) if compute_dtype is not None else x.dtype

    # Effective tile sizes clipped to the (padded) problem, TPU-aligned:
    # last dims multiples of 128 (lanes), second-to-last multiples of 8.
    tm = min(tm, _round_up(B, 8))
    tn = min(tn, _round_up(D_out, 128))
    tk = min(tk, _round_up(D_in, 128))

    Bp = _round_up(B, tm)
    Np = _round_up(D_out, tn)
    Kp = _round_up(D_in, tk)

    # Pre-transpose the weight once in the wrapper (foldable into parameter
    # storage) and zero-pad only when needed.  Zero K-padding is exact.
    w_t = weight.T                                            # (D_in, D_out)
    x_p = x if (Bp == B and Kp == D_in) else jnp.pad(x, ((0, Bp - B), (0, Kp - D_in)))
    w_p = w_t if (Kp == D_in and Np == D_out) else jnp.pad(
        w_t, ((0, Kp - D_in), (0, Np - D_out)))
    b_p = bias if Np == D_out else jnp.pad(bias, (0, Np - D_out))

    x_p = x_p.astype(cdt)
    w_p = w_p.astype(cdt)
    b_p = b_p.reshape(1, Np).astype(jnp.float32)

    n_k = Kp // tk
    bytes_accessed = (
        x_p.size * x_p.dtype.itemsize
        + w_p.size * w_p.dtype.itemsize
        + b_p.size * b_p.dtype.itemsize
        + Bp * Np * jnp.dtype(out_dtype).itemsize
    )
    cost = pl.CostEstimate(
        flops=2 * Bp * Kp * Np, transcendentals=0, bytes_accessed=bytes_accessed
    )

    if n_k == 1:
        # 2-D grid, no accumulator scratch, no phase gating.
        grid = (Bp // tm, Np // tn)
        out = pl.pallas_call(
            _linear_kernel_single_k,
            out_shape=jax.ShapeDtypeStruct((Bp, Np), out_dtype),
            grid_spec=pltpu.PrefetchScalarGridSpec(
                num_scalar_prefetch=0,
                grid=grid,
                in_specs=[
                    pl.BlockSpec((tm, tk), lambda i, j: (i, 0)),
                    pl.BlockSpec((tk, tn), lambda i, j: (0, j)),
                    pl.BlockSpec((1, tn), lambda i, j: (0, j)),
                ],
                out_specs=pl.BlockSpec((tm, tn), lambda i, j: (i, j)),
            ),
            compiler_params=pltpu.CompilerParams(
                dimension_semantics=("parallel", "parallel"),
            ),
            cost_estimate=cost,
        )(x_p, w_p, b_p)
    else:
        # 3-D grid with K reduction accumulated in f32 VMEM scratch.
        grid = (Bp // tm, Np // tn, n_k)
        out = pl.pallas_call(
            _linear_kernel_multi_k,
            out_shape=jax.ShapeDtypeStruct((Bp, Np), out_dtype),
            grid_spec=pltpu.PrefetchScalarGridSpec(
                num_scalar_prefetch=0,
                grid=grid,
                in_specs=[
                    pl.BlockSpec((tm, tk), lambda i, j, k: (i, k)),
                    pl.BlockSpec((tk, tn), lambda i, j, k: (k, j)),
                    # Bias block independent of i/k -> stays resident per j.
                    pl.BlockSpec((1, tn), lambda i, j, k: (0, j)),
                ],
                out_specs=pl.BlockSpec((tm, tn), lambda i, j, k: (i, j)),
                scratch_shapes=[pltpu.VMEM((tm, tn), jnp.float32)],
            ),
            compiler_params=pltpu.CompilerParams(
                dimension_semantics=("parallel", "parallel", "arbitrary"),
            ),
            cost_estimate=cost,
        )(x_p, w_p, b_p)

    if Bp == B and Np == D_out:
        return out
    return out[:B, :D_out]


if __name__ == "__main__":
    # Small shapes consistent with LinearRegressionModel(input_dim, output_dim)
    batch, input_dim, output_dim = 8, 32, 16

    key = jax.random.PRNGKey(0)
    kx, kw, kb = jax.random.split(key, 3)

    x = jax.random.normal(kx, (batch, input_dim), dtype=jnp.float32)

    # Deterministic parameter init mimicking nn.Linear's U(-1/sqrt(fan_in), ...)
    bound = 1.0 / (input_dim ** 0.5)
    weight = jax.random.uniform(
        kw, (output_dim, input_dim), dtype=jnp.float32, minval=-bound, maxval=bound
    )
    bias = jax.random.uniform(
        kb, (output_dim,), dtype=jnp.float32, minval=-bound, maxval=bound
    )

    # f32 path (exact vs. reference).
    y = linear_forward(x, weight, bias)
    jax.block_until_ready(y)

    y_ref = x @ weight.T + bias
    assert y.shape == (batch, output_dim)
    assert jnp.allclose(y, y_ref, atol=1e-5, rtol=1e-5)

    # bf16 compute path (MXU-native on v6e/v7x); f32 accumulation keeps it safe.
    y_bf16 = linear_forward(x, weight, bias, compute_dtype=jnp.bfloat16)
    jax.block_until_ready(y_bf16)
    assert jnp.allclose(y_bf16, y_ref, atol=5e-2, rtol=5e-2)

    # Exercise the multi-K (3-D grid, accumulator) path with a larger reduction.
    batch2, in2, out2 = 256, 1024, 384
    k2 = jax.random.PRNGKey(1)
    kx2, kw2, kb2 = jax.random.split(k2, 3)
    x2 = jax.random.normal(kx2, (batch2, in2), dtype=jnp.float32)
    w2 = jax.random.normal(kw2, (out2, in2), dtype=jnp.float32) * 0.02
    b2 = jax.random.normal(kb2, (out2,), dtype=jnp.float32)
    y2 = linear_forward(x2, w2, b2, tk=512)
    jax.block_until_ready(y2)
    y2_ref = x2 @ w2.T + b2
    assert jnp.allclose(y2, y2_ref, atol=1e-3, rtol=1e-3)

    print("KERNEL_OK")
</pallas_src>

<mosaic_0001>
module attributes {stable_mosaic.version = 11 : i64} {
  func.func @_linear_kernel_single_k(%arg0: i32, %arg1: i32, %arg2: memref<8x128xf32, #tpu.memory_space<vmem>>, %arg3: memref<128x128xf32, #tpu.memory_space<vmem>>, %arg4: memref<1x128xf32, #tpu.memory_space<vmem>>, %arg5: memref<8x128xf32, #tpu.memory_space<vmem>>) attributes {dimension_semantics = [#tpu.dimension_semantics<parallel>, #tpu.dimension_semantics<parallel>], iteration_bounds = array<i64: 1, 1>, scalar_prefetch = 0 : i64, scratch_operands = 0 : i64, tpu.core_type = #tpu.core_type<tc>, window_params = [{transform_indices = @transform_0, window_bounds = array<i64: 8, 128>}, {transform_indices = @transform_1, window_bounds = array<i64: 128, 128>}, {transform_indices = @transform_2, window_bounds = array<i64: 1, 128>}, {transform_indices = @transform_3, window_bounds = array<i64: 8, 128>}]} {
    %c0 = arith.constant 0 : index
    %c0_0 = arith.constant 0 : index
    %0 = vector.load %arg2[%c0, %c0_0] : memref<8x128xf32, #tpu.memory_space<vmem>>, vector<8x128xf32>
    %c0_1 = arith.constant 0 : index
    %c0_2 = arith.constant 0 : index
    %1 = vector.load %arg3[%c0_1, %c0_2] : memref<128x128xf32, #tpu.memory_space<vmem>>, vector<128x128xf32>
    %cst = arith.constant dense<0.000000e+00> : vector<8x128xf32>
    %2 = tpu.matmul %0, %1, %cst {dimension_numbers = #tpu.dot_dimension_numbers<[1], [0], [0], [1], [0, 0, 1, 1], [], []>} : vector<8x128xf32>, vector<128x128xf32>, vector<8x128xf32> -> vector<8x128xf32>
    %c0_3 = arith.constant 0 : index
    %c0_4 = arith.constant 0 : index
    %3 = vector.load %arg4[%c0_3, %c0_4] : memref<1x128xf32, #tpu.memory_space<vmem>>, vector<1x128xf32>
    %4 = vector.broadcast %3 : vector<1x128xf32> to vector<8x128xf32>
    %5 = arith.addf %2, %4 : vector<8x128xf32>
    %c0_5 = arith.constant 0 : index
    %c0_6 = arith.constant 0 : index
    %6 = vector.load %arg5[%c0_5, %c0_6] : memref<8x128xf32, #tpu.memory_space<vmem>>, vector<8x128xf32>
    tpu.vector_store %arg5[%c0_5, %c0_6], %5 {strides = array<i32>} : memref<8x128xf32, #tpu.memory_space<vmem>>, vector<8x128xf32>,
    return
  }
  func.func @transform_0(%arg0: i32, %arg1: i32) -> (i32, i32) {
    %c0_i32 = arith.constant 0 : i32
    %c0_i32_0 = arith.constant 0 : i32
    return %arg0, %c0_i32 : i32, i32
  }
  func.func @transform_1(%arg0: i32, %arg1: i32) -> (i32, i32) {
    %c0_i32 = arith.constant 0 : i32
    %c0_i32_0 = arith.constant 0 : i32
    return %c0_i32, %arg1 : i32, i32
  }
  func.func @transform_2(%arg0: i32, %arg1: i32) -> (i32, i32) {
    %c0_i32 = arith.constant 0 : i32
    %c0_i32_0 = arith.constant 0 : i32
    return %c0_i32, %arg1 : i32, i32
  }
  func.func @transform_3(%arg0: i32, %arg1: i32) -> (i32, i32) {
    %c0_i32 = arith.constant 0 : i32
    return %arg0, %arg1 : i32, i32
  }
}

</mosaic_0001>

<llo_original>
// kernel: linear_forward.1
$region0: #{linear_forward.1}
  #allocation0 [shape = 'u32[]', space=smem, size = 0x4, offset = 0x4, fixed_abs, tag = 'smem constant byte address 0x4 - core index']
  #allocation1 [shape = 'u32[144,128]{1,0:T(1,128)}', space=vmem, size = 0x12000, scoped, tag = 'internal scratch']
  %s0 = inlined_call_operand.vmem [shape: f32[8,128], index: 0, kind: input, shape index: {}]
  %s1 = inlined_call_operand.vmem [shape: f32[128,128], index: 1, kind: input, shape index: {}]
  %s2 = inlined_call_operand.vmem [shape: f32[1,128], index: 2, kind: input, shape index: {}]
  %s3 = inlined_call_operand.hbm [shape: f32[8,128], index: 3, kind: output, shape index: {}]
  %s4 = sld [smem:[#allocation0]]
  $region22: #{linear_forward.1} parent=0
    _
  %s6 = ssub.s32 1, %s4
  %s7 = scalar_select 0, %s6, %s4
  $region1: #{linear_forward.1} parent=0
    #allocation2 [shape = 'u8[4096]{0}', space=vmem, size = 0x1000, scoped, tag = 'output window, operand 0, single buffered']
    #allocation3 [shape = 's32[1]{0}', space=sflag, size = 0x4, scoped, tag = 'scoped memory for linear_forward.1']
    %8 = vsyncpa [#allocation3], 0
    // Predicated region
    $region2: #{linear_forward.1} parent=1 // pred_check
      _
    $region3: #{linear_forward.1} parent=1 // pred_check_branch
      %10 = sbr.rel (0) target = $region5
    $region4: #{linear_forward.1} parent=1 // pred_region
      _
    $region5: #{linear_forward.1} parent=1 // pred_fallthru
      _
    // Predicated region
    $region6: #{linear_forward.1} parent=1 // pred_check
      _
    $region7: #{linear_forward.1} parent=1 // pred_check_branch
      %12 = sbr.rel (0) target = $region9
    $region8: #{linear_forward.1} parent=1 // pred_region
      _
    $region9: #{linear_forward.1} parent=1 // pred_fallthru
      _
    // Predicated region
    $region10: #{linear_forward.1} parent=1 // pred_check
      _
    $region11: #{linear_forward.1} parent=1 // pred_check_branch
      %14 = sbr.rel (0) target = $region13
    $region12: #{linear_forward.1} parent=1 // pred_region
      _
    $region13: #{linear_forward.1} parent=1 // pred_fallthru
      _
    %v15 = vld [vmem:[%s0] sm:$0xff]
    %v16 = vld [vmem:[%s1] sm:$0xff]
    %v17 = vld [vmem:[%s1 + $0x8] sm:$0xff]
    %v18 = vld [vmem:[%s1 + $0x10] sm:$0xff]
    %v19 = vld [vmem:[%s1 + $0x18] sm:$0xff]
    %v20 = vld [vmem:[%s1 + $0x20] sm:$0xff]
    %v21 = vld [vmem:[%s1 + $0x28] sm:$0xff]
    %v22 = vld [vmem:[%s1 + $0x30] sm:$0xff]
    %v23 = vld [vmem:[%s1 + $0x38] sm:$0xff]
    %v24 = vld [vmem:[%s1 + $0x40] sm:$0xff]
    %v25 = vld [vmem:[%s1 + $0x48] sm:$0xff]
    %v26 = vld [vmem:[%s1 + $0x50] sm:$0xff]
    %v27 = vld [vmem:[%s1 + $0x58] sm:$0xff]
    %v28 = vld [vmem:[%s1 + $0x60] sm:$0xff]
    %v29 = vld [vmem:[%s1 + $0x68] sm:$0xff]
    %v30 = vld [vmem:[%s1 + $0x70] sm:$0xff]
    %v31 = vld [vmem:[%s1 + $0x78] sm:$0xff]
    %v32 = vld [vmem:[%s2] sm:$0x1]
    %v34 = vlaneseq
    %v35 = vshrl.u32 %v34, 7
    %v36 = vsub.s32 0, %v35
    %v37 = vrot.slane %v32, %v36
    %39 = vmatprep.subr.mxu0 0.0
    %40 = vmatpush1.msra.mxu0 %v16
    %41 = vmatprep.subr.mxu0 0.0
    %42 = vmatpush1.msra.mxu0 %v17
    %43 = vmatprep.subr.mxu0 0.0
    %44 = vmatpush1.msra.mxu0 %v18
    %45 = vmatprep.subr.mxu0 0.0
    %46 = vmatpush1.msra.mxu0 %v19
    %47 = vmatprep.subr.mxu0 0.0
    %48 = vmatpush1.msra.mxu0 %v20
    %49 = vmatprep.subr.mxu0 0.0
    %50 = vmatpush1.msra.mxu0 %v21
    %51 = vmatprep.subr.mxu0 0.0
    %52 = vmatpush1.msra.mxu0 %v22
    %53 = vmatprep.subr.mxu0 0.0
    %54 = vmatpush1.msra.mxu0 %v23
    %55 = vmatprep.subr.mxu0 0.0
    %56 = vmatpush1.msra.mxu0 %v24
    %57 = vmatprep.subr.mxu0 0.0
    %58 = vmatpush1.msra.mxu0 %v25
    %59 = vmatprep.subr.mxu0 0.0
    %60 = vmatpush1.msra.mxu0 %v26
    %61 = vmatprep.subr.mxu0 0.0
    %62 = vmatpush1.msra.mxu0 %v27
    %63 = vmatprep.subr.mxu0 0.0
    %64 = vmatpush1.msra.mxu0 %v28
    %65 = vmatprep.subr.mxu0 0.0
    %66 = vmatpush1.msra.mxu0 %v29
    %67 = vmatprep.subr.mxu0 0.0
    %68 = vmatpush1.msra.mxu0 %v30
    %69 = vmatprep.subr.mxu0 0.0
    %70 = vmatpush1.msra.mxu0 %v31
    %71 = vmatprep.subr.mxu0 0.0
    %72 = vmatpush1.msra.mxu0 0.0
    %73 = vmatprep.subr.mxu0 0.0
    %74 = vmatpush1.msra.mxu0 0.0
    %75 = vmatprep.subr.mxu0 0.0
    %76 = vmatpush1.msra.mxu0 0.0
    %77 = vmatprep.subr.mxu0 0.0
    %78 = vmatpush1.msra.mxu0 0.0
    %79 = vmatprep.subr.mxu0 0.0
    %80 = vmatpush1.msra.mxu0 0.0
    %81 = vmatprep.subr.mxu0 0.0
    %82 = vmatpush1.msra.mxu0 0.0
    %83 = vmatprep.subr.mxu0 0.0
    %84 = vmatpush1.msra.mxu0 0.0
    %85 = vmatprep.subr.mxu0 0.0
    %86 = vmatpush1.msra.mxu0 0.0
    %87 = vmatprep.subr.mxu0 0.0
    %88 = vmatpush1.msra.mxu0 0.0
    %89 = vmatprep.subr.mxu0 0.0
    %90 = vmatpush1.msra.mxu0 0.0
    %91 = vmatprep.subr.mxu0 0.0
    %92 = vmatpush1.msra.mxu0 0.0
    %93 = vmatprep.subr.mxu0 0.0
    %94 = vmatpush1.msra.mxu0 0.0
    %95 = vmatprep.subr.mxu0 0.0
    %96 = vmatpush1.msra.mxu0 0.0
    %97 = vmatprep.subr.mxu0 0.0
    %98 = vmatpush1.msra.mxu0 0.0
    %99 = vmatprep.subr.mxu0 0.0
    %100 = vmatpush1.msra.mxu0 0.0
    %101 = vmatprep.subr.mxu0 0.0
    %102 = vmatpush1.msra.mxu0 0.0
    %103 = vmatprep.mubr.f32.mxu0 0.0
    %104 = vmatmul.mubr.f32.gmra.mrb[0].mxu0 %v15
    %v105 = vpop.f32.mrb[0].mxu0
    %v106 = vadd.f32 %v37, %v105
    %v107 = vpop.f32.mrb[0].mxu0
    %108 = vdwg.mxu0
    %109 = vst [vmem:[#allocation2] sm:$0xff] %v106
    // Predicated region
    $region14: #{linear_forward.1} parent=1 // pred_check
      _
    $region15: #{linear_forward.1} parent=1 // pred_check_branch
      %111 = sbr.rel (0) target = $region17
    $region16: #{linear_forward.1} parent=1 // pred_region
      %s113 = ssub.s32 128, 128
      %114 = vsyncadd [#allocation3], %s113
      %s116 = sshll.u32 [#allocation2], 4
      %s117 = int_to_ptr.vmem [resolvable:$true] %s116
      %119 = dma.vmem_to_hbm [thread:$0]  %s117, 128, %s3, [#allocation3]
    $region17: #{linear_forward.1} parent=1 // pred_fallthru
      _
    // Predicated region
    $region18: #{linear_forward.1} parent=1 // pred_check
      _
    $region19: #{linear_forward.1} parent=1 // pred_check_branch
      %121 = sbr.rel (0) target = $region21
    $region20: #{linear_forward.1} parent=1 // pred_region
      %122 = dma.done [#allocation3], 128
    $region21: #{linear_forward.1} parent=1 // pred_fallthru
      _
    %123 = vsyncpa [#allocation3], 1

</llo_original>
